<compile_context>
chip_gen: v7x
topology: tpu7x:2x2x1
jax: 0.10.0
libtpu: 0.0.40
codegen_flags: <defaults>
</compile_context>

<pallas_src>
import math
from functools import partial

import jax
import jax.numpy as jnp
from jax.experimental import pallas as pl
from jax.experimental.pallas import tpu as pltpu

_LANE = 128      # vreg lane width
_SUBLANE = 8     # vreg sublane count (f32)
_MAX_BATCH_TILE = 256   # rows per grid step (multiple of 8; VMEM-friendly)


def _round_up(n, m):
    return ((n + m - 1) // m) * m


# ---------------------------------------------------------------------------
# Fused-MLP kernel: all layers chained inside one kernel body.
# refs = (x_ref, w0_ref, b0_ref, w1_ref, b1_ref, ..., o_ref)
# ---------------------------------------------------------------------------
def _fused_mlp_kernel(*refs, num_layers):
    x_ref = refs[0]
    o_ref = refs[-1]
    p = refs[1:-1]

    h = x_ref[...]                                            # (bt, Ip) f32
    for i in range(num_layers):
        w = p[2 * i][...]                                     # (Ip_i, Op_i)
        b = p[2 * i + 1][...]                                 # (1,   Op_i)
        y = jnp.dot(h, w, preferred_element_type=jnp.float32) + b
        h = jax.nn.sigmoid(y)                                 # f32 elementwise
    o_ref[...] = h.astype(o_ref.dtype)


def fused_mlp_forward(x, flat_padded_params, out_dim):
    """Run the whole (padded) MLP in one pallas_call, batch-tiled over a grid.

    x:                  (batch, in_features) unpadded input.
    flat_padded_params: (w0, b0, w1, b1, ...) already lane-padded; w_i is
                        (Ip_i, Op_i), b_i is (1, Op_i), Ip/Op multiples of 128.
    out_dim:            true (unpadded) output feature count.
    """
    assert len(flat_padded_params) % 2 == 0
    num_layers = len(flat_padded_params) // 2

    batch, in_f = x.shape
    ip = flat_padded_params[0].shape[0]
    op_last = flat_padded_params[-2].shape[1]

    # Batch tile: multiple of 8 sublanes, capped so per-step VMEM stays small.
    bt = min(_round_up(max(batch, _SUBLANE), _SUBLANE), _MAX_BATCH_TILE)
    bp = _round_up(batch, bt)
    n_tiles = bp // bt

    # Lane/sublane-pad the input (zeros in padded lanes/rows are killed by the
    # zero-padded weight rows of layer 0 / sliced off at the end).
    x_p = jnp.zeros((bp, ip), jnp.float32).at[:batch, :in_f].set(
        x.astype(jnp.float32))

    # Input tile walks the batch; weights/biases use a constant block index so
    # Pallas keeps them resident in VMEM across grid steps (no re-DMA).
    in_specs = [pl.BlockSpec((bt, ip), lambda i: (i, 0))]
    for r in flat_padded_params:
        in_specs.append(pl.BlockSpec(r.shape, lambda i: (0, 0)))

    out_p = pl.pallas_call(
        partial(_fused_mlp_kernel, num_layers=num_layers),
        out_shape=jax.ShapeDtypeStruct((bp, op_last), x.dtype),
        grid=(n_tiles,),
        in_specs=in_specs,
        out_specs=pl.BlockSpec((bt, op_last), lambda i: (i, 0)),
        compiler_params=pltpu.CompilerParams(
            dimension_semantics=("parallel",)),
    )(x_p, *flat_padded_params)

    return out_p[:batch, :out_dim]


# ---------------------------------------------------------------------------
# Parameter construction (mirrors FullyConnectedNetwork.__init__ / nn.Linear)
# ---------------------------------------------------------------------------
def init_fully_connected_params(key, sizes, input_dim=None, output_dim=None):
    """Mirror FullyConnectedNetwork.__init__: sizes is the hidden list,
    `input_dim` prepended, `output_dim` appended.  nn.Linear default init:
    U(-1/sqrt(fan_in), 1/sqrt(fan_in)).  Weights stored as (in, out)."""
    dims = list(sizes)
    if input_dim is not None:
        dims = [input_dim] + dims
    if output_dim is not None:
        dims = dims + [output_dim]

    params = []
    for i in range(len(dims) - 1):
        fan_in, fan_out = dims[i], dims[i + 1]
        key, kw, kb = jax.random.split(key, 3)
        bound = 1.0 / math.sqrt(fan_in)
        w = jax.random.uniform(kw, (fan_in, fan_out), jnp.float32, -bound, bound)
        b = jax.random.uniform(kb, (fan_out,), jnp.float32, -bound, bound)
        params.append((w, b))
    return params


def pad_params_for_tpu(params):
    """Zero-pad (in, out) to multiples of 128 lanes; bias pre-shaped (1, out_p)."""
    flat = []
    for w, b in params:
        in_f, out_f = w.shape
        ip, op = _round_up(in_f, _LANE), _round_up(out_f, _LANE)
        wp = jnp.zeros((ip, op), w.dtype).at[:in_f, :out_f].set(w)
        bp = jnp.zeros((1, op), b.dtype).at[0, :out_f].set(b)
        flat.extend([wp, bp])
    return tuple(flat)


def reference_forward(x, params):
    X = x
    for w, b in params:
        X = jax.nn.sigmoid(X @ w + b)
    return X


if __name__ == "__main__":
    key = jax.random.PRNGKey(0)

    # --- Config A: the exact `Network` tail ---------------------------------
    # FullyConnectedNetwork(sizes=[], input=hidden_size, output=n_labels)
    # -> a single Linear(hidden_size, n_labels) + sigmoid.
    batch = 8
    hidden_size = 16        # output width of the (unspecified) `head`
    n_labels = 8            # batch.index_frame.label.nunique()

    key, kx = jax.random.split(key)
    x = jax.random.normal(kx, (batch, hidden_size), dtype=jnp.float32)

    key, kp = jax.random.split(key)
    params_a = init_fully_connected_params(kp, [], hidden_size, n_labels)
    flat_a = pad_params_for_tpu(params_a)

    fwd_a = jax.jit(lambda xx, *fp: fused_mlp_forward(xx, fp, n_labels))
    out_a = jax.block_until_ready(fwd_a(x, *flat_a))
    ref_a = reference_forward(x, params_a)
    assert out_a.shape == (batch, n_labels)
    assert jnp.allclose(out_a, ref_a, atol=1e-5, rtol=1e-5), \
        "mismatch vs pure-JAX reference (Network tail)"

    # --- Config B: multi-layer FullyConnectedNetwork (fused-chain path) -----
    sizes = [64, 32]
    input_dim, output_dim = 16, 8
    batch_b = 32

    key, kx2, kp2 = jax.random.split(key, 3)
    x_b = jax.random.normal(kx2, (batch_b, input_dim), dtype=jnp.float32)
    params_b = init_fully_connected_params(kp2, sizes, input_dim, output_dim)
    flat_b = pad_params_for_tpu(params_b)

    fwd_b = jax.jit(lambda xx, *fp: fused_mlp_forward(xx, fp, output_dim))
    out_b = jax.block_until_ready(fwd_b(x_b, *flat_b))
    ref_b = reference_forward(x_b, params_b)
    assert out_b.shape == (batch_b, output_dim)
    assert jnp.allclose(out_b, ref_b, atol=1e-5, rtol=1e-5), \
        "mismatch vs pure-JAX reference (multi-layer)"

    print("KERNEL_OK")
</pallas_src>

<mosaic_0001>
module attributes {stable_mosaic.version = 11 : i64} {
  func.func @_fused_mlp_kernel(%arg0: i32, %arg1: memref<8x128xf32, #tpu.memory_space<vmem>>, %arg2: memref<128x128xf32, #tpu.memory_space<vmem>>, %arg3: memref<1x128xf32, #tpu.memory_space<vmem>>, %arg4: memref<8x128xf32, #tpu.memory_space<vmem>>) attributes {dimension_semantics = [#tpu.dimension_semantics<parallel>], iteration_bounds = array<i64: 1>, scalar_prefetch = 0 : i64, scratch_operands = 0 : i64, tpu.core_type = #tpu.core_type<tc>, window_params = [{transform_indices = @transform_0, window_bounds = array<i64: 8, 128>}, {pipeline_mode = #tpu.pipeline_mode<synchronous>, transform_indices = @transform_1, window_bounds = array<i64: 128, 128>}, {pipeline_mode = #tpu.pipeline_mode<synchronous>, transform_indices = @transform_2, window_bounds = array<i64: 1, 128>}, {transform_indices = @transform_3, window_bounds = array<i64: 8, 128>}]} {
    %c0 = arith.constant 0 : index
    %c0_0 = arith.constant 0 : index
    %0 = vector.load %arg1[%c0, %c0_0] : memref<8x128xf32, #tpu.memory_space<vmem>>, vector<8x128xf32>
    %c0_1 = arith.constant 0 : index
    %c0_2 = arith.constant 0 : index
    %1 = vector.load %arg2[%c0_1, %c0_2] : memref<128x128xf32, #tpu.memory_space<vmem>>, vector<128x128xf32>
    %c0_3 = arith.constant 0 : index
    %c0_4 = arith.constant 0 : index
    %2 = vector.load %arg3[%c0_3, %c0_4] : memref<1x128xf32, #tpu.memory_space<vmem>>, vector<1x128xf32>
    %cst = arith.constant dense<0.000000e+00> : vector<8x128xf32>
    %3 = tpu.matmul %0, %1, %cst {dimension_numbers = #tpu.dot_dimension_numbers<[1], [0], [0], [1], [0, 0, 1, 1], [], []>} : vector<8x128xf32>, vector<128x128xf32>, vector<8x128xf32> -> vector<8x128xf32>
    %4 = vector.broadcast %2 : vector<1x128xf32> to vector<8x128xf32>
    %5 = arith.addf %3, %4 : vector<8x128xf32>
    %6 = arith.negf %5 : vector<8x128xf32>
    %7 = math.exp %6 : vector<8x128xf32>
    %cst_5 = arith.constant 1.000000e+00 : f32
    %8 = vector.broadcast %cst_5 : f32 to vector<8x128xf32>
    %9 = arith.addf %8, %7 : vector<8x128xf32>
    %10 = arith.divf %8, %9 : vector<8x128xf32>
    %c0_6 = arith.constant 0 : index
    %c0_7 = arith.constant 0 : index
    %11 = vector.load %arg4[%c0_6, %c0_7] : memref<8x128xf32, #tpu.memory_space<vmem>>, vector<8x128xf32>
    tpu.vector_store %arg4[%c0_6, %c0_7], %10 {strides = array<i32>} : memref<8x128xf32, #tpu.memory_space<vmem>>, vector<8x128xf32>,
    return
  }
  func.func @transform_0(%arg0: i32) -> (i32, i32) {
    %c0_i32 = arith.constant 0 : i32
    %c0_i32_0 = arith.constant 0 : i32
    return %arg0, %c0_i32 : i32, i32
  }
  func.func @transform_1(%arg0: i32) -> (i32, i32) {
    %c0_i32 = arith.constant 0 : i32
    %c0_i32_0 = arith.constant 0 : i32
    %c0_i32_1 = arith.constant 0 : i32
    return %c0_i32, %c0_i32_0 : i32, i32
  }
  func.func @transform_2(%arg0: i32) -> (i32, i32) {
    %c0_i32 = arith.constant 0 : i32
    %c0_i32_0 = arith.constant 0 : i32
    %c0_i32_1 = arith.constant 0 : i32
    return %c0_i32, %c0_i32_0 : i32, i32
  }
  func.func @transform_3(%arg0: i32) -> (i32, i32) {
    %c0_i32 = arith.constant 0 : i32
    %c0_i32_0 = arith.constant 0 : i32
    return %arg0, %c0_i32 : i32, i32
  }
}

</mosaic_0001>

<llo_original>
// kernel: _lambda_.1
$region0: #{_lambda_.1}
  #allocation0 [shape = 'u32[]', space=smem, size = 0x4, offset = 0x4, fixed_abs, tag = 'smem constant byte address 0x4 - core index']
  #allocation1 [shape = 'u32[144,128]{1,0:T(1,128)}', space=vmem, size = 0x12000, scoped, tag = 'internal scratch']
  %s0 = inlined_call_operand.vmem [shape: f32[8,128], index: 0, kind: input, shape index: {}]
  %s1 = inlined_call_operand.hbm [shape: f32[128,128], index: 1, kind: input, shape index: {}]
  %s2 = inlined_call_operand.vmem [shape: f32[1,128], index: 2, kind: input, shape index: {}]
  %s3 = inlined_call_operand.hbm [shape: f32[8,128], index: 3, kind: output, shape index: {}]
  %s4 = sld [smem:[#allocation0]]
  $region26: #{_lambda_.1} parent=0
    _
  %s6 = ssub.s32 1, %s4
  %s7 = scalar_select 0, %s6, %s4
  $region1: #{_lambda_.1} parent=0
    #allocation2 [shape = 'u8[65536]{0}', space=vmem, size = 0x10000, scoped, tag = 'input window, operand 1, single buffered']
    #allocation3 [shape = 's32[1]{0}', space=sflag, size = 0x4, scoped, tag = 'scoped memory for _lambda_.1']
    #allocation4 [shape = 's32[1]{0}', space=sflag, size = 0x4, scoped, tag = 'scoped memory for _lambda_.1']
    #allocation5 [shape = 'u8[4096]{0}', space=vmem, size = 0x1000, scoped, tag = 'output window, operand 0, single buffered']
    %8 = vsyncpa [#allocation3], 0
    %9 = vsyncpa [#allocation4], 0
    // Predicated region
    $region2: #{_lambda_.1} parent=1 // pred_check
      _
    $region3: #{_lambda_.1} parent=1 // pred_check_branch
      %11 = sbr.rel (0) target = $region5
    $region4: #{_lambda_.1} parent=1 // pred_region
      _
    $region5: #{_lambda_.1} parent=1 // pred_fallthru
      _
    // Predicated region
    $region6: #{_lambda_.1} parent=1 // pred_check
      _
    $region7: #{_lambda_.1} parent=1 // pred_check_branch
      %13 = sbr.rel (0) target = $region9
    $region8: #{_lambda_.1} parent=1 // pred_region
      %s15 = ssub.s32 2048, 2048
      %16 = vsyncadd [#allocation3], %s15
      %s17 = sshll.u32 [#allocation2], 4
      %s18 = int_to_ptr.vmem [resolvable:$true] %s17
      %23 = dma.hbm_to_vmem [thread:$0]  %s1, 2048, %s18, [#allocation3], 128, 128, 8
    $region9: #{_lambda_.1} parent=1 // pred_fallthru
      _
    // Predicated region
    $region10: #{_lambda_.1} parent=1 // pred_check
      _
    $region11: #{_lambda_.1} parent=1 // pred_check_branch
      %25 = sbr.rel (0) target = $region13
    $region12: #{_lambda_.1} parent=1 // pred_region
      _
    $region13: #{_lambda_.1} parent=1 // pred_fallthru
      _
    // Predicated region
    $region14: #{_lambda_.1} parent=1 // pred_check
      _
    $region15: #{_lambda_.1} parent=1 // pred_check_branch
      %27 = sbr.rel (0) target = $region17
    $region16: #{_lambda_.1} parent=1 // pred_region
      %28 = dma.done [#allocation3], 2048
    $region17: #{_lambda_.1} parent=1 // pred_fallthru
      _
    %v29 = vld [vmem:[%s0] sm:$0xff]
    %v30 = vld [vmem:[#allocation2] sm:$0xff]
    %v31 = vld [vmem:[#allocation2 + $0x8] sm:$0xff]
    %v32 = vld [vmem:[#allocation2 + $0x10] sm:$0xff]
    %v33 = vld [vmem:[#allocation2 + $0x18] sm:$0xff]
    %v34 = vld [vmem:[#allocation2 + $0x20] sm:$0xff]
    %v35 = vld [vmem:[#allocation2 + $0x28] sm:$0xff]
    %v36 = vld [vmem:[#allocation2 + $0x30] sm:$0xff]
    %v37 = vld [vmem:[#allocation2 + $0x38] sm:$0xff]
    %v38 = vld [vmem:[#allocation2 + $0x40] sm:$0xff]
    %v39 = vld [vmem:[#allocation2 + $0x48] sm:$0xff]
    %v40 = vld [vmem:[#allocation2 + $0x50] sm:$0xff]
    %v41 = vld [vmem:[#allocation2 + $0x58] sm:$0xff]
    %v42 = vld [vmem:[#allocation2 + $0x60] sm:$0xff]
    %v43 = vld [vmem:[#allocation2 + $0x68] sm:$0xff]
    %v44 = vld [vmem:[#allocation2 + $0x70] sm:$0xff]
    %v45 = vld [vmem:[#allocation2 + $0x78] sm:$0xff]
    %v46 = vld [vmem:[%s2] sm:$0x1]
    %v48 = vlaneseq
    %v49 = vshrl.u32 %v48, 7
    %v50 = vsub.s32 0, %v49
    %v51 = vrot.slane %v46, %v50
    %53 = vmatprep.subr.mxu0 0.0
    %54 = vmatpush1.msra.mxu0 %v30
    %55 = vmatprep.subr.mxu0 0.0
    %56 = vmatpush1.msra.mxu0 %v31
    %57 = vmatprep.subr.mxu0 0.0
    %58 = vmatpush1.msra.mxu0 %v32
    %59 = vmatprep.subr.mxu0 0.0
    %60 = vmatpush1.msra.mxu0 %v33
    %61 = vmatprep.subr.mxu0 0.0
    %62 = vmatpush1.msra.mxu0 %v34
    %63 = vmatprep.subr.mxu0 0.0
    %64 = vmatpush1.msra.mxu0 %v35
    %65 = vmatprep.subr.mxu0 0.0
    %66 = vmatpush1.msra.mxu0 %v36
    %67 = vmatprep.subr.mxu0 0.0
    %68 = vmatpush1.msra.mxu0 %v37
    %69 = vmatprep.subr.mxu0 0.0
    %70 = vmatpush1.msra.mxu0 %v38
    %71 = vmatprep.subr.mxu0 0.0
    %72 = vmatpush1.msra.mxu0 %v39
    %73 = vmatprep.subr.mxu0 0.0
    %74 = vmatpush1.msra.mxu0 %v40
    %75 = vmatprep.subr.mxu0 0.0
    %76 = vmatpush1.msra.mxu0 %v41
    %77 = vmatprep.subr.mxu0 0.0
    %78 = vmatpush1.msra.mxu0 %v42
    %79 = vmatprep.subr.mxu0 0.0
    %80 = vmatpush1.msra.mxu0 %v43
    %81 = vmatprep.subr.mxu0 0.0
    %82 = vmatpush1.msra.mxu0 %v44
    %83 = vmatprep.subr.mxu0 0.0
    %84 = vmatpush1.msra.mxu0 %v45
    %85 = vmatprep.subr.mxu0 0.0
    %86 = vmatpush1.msra.mxu0 0.0
    %87 = vmatprep.subr.mxu0 0.0
    %88 = vmatpush1.msra.mxu0 0.0
    %89 = vmatprep.subr.mxu0 0.0
    %90 = vmatpush1.msra.mxu0 0.0
    %91 = vmatprep.subr.mxu0 0.0
    %92 = vmatpush1.msra.mxu0 0.0
    %93 = vmatprep.subr.mxu0 0.0
    %94 = vmatpush1.msra.mxu0 0.0
    %95 = vmatprep.subr.mxu0 0.0
    %96 = vmatpush1.msra.mxu0 0.0
    %97 = vmatprep.subr.mxu0 0.0
    %98 = vmatpush1.msra.mxu0 0.0
    %99 = vmatprep.subr.mxu0 0.0
    %100 = vmatpush1.msra.mxu0 0.0
    %101 = vmatprep.subr.mxu0 0.0
    %102 = vmatpush1.msra.mxu0 0.0
    %103 = vmatprep.subr.mxu0 0.0
    %104 = vmatpush1.msra.mxu0 0.0
    %105 = vmatprep.subr.mxu0 0.0
    %106 = vmatpush1.msra.mxu0 0.0
    %107 = vmatprep.subr.mxu0 0.0
    %108 = vmatpush1.msra.mxu0 0.0
    %109 = vmatprep.subr.mxu0 0.0
    %110 = vmatpush1.msra.mxu0 0.0
    %111 = vmatprep.subr.mxu0 0.0
    %112 = vmatpush1.msra.mxu0 0.0
    %113 = vmatprep.subr.mxu0 0.0
    %114 = vmatpush1.msra.mxu0 0.0
    %115 = vmatprep.subr.mxu0 0.0
    %116 = vmatpush1.msra.mxu0 0.0
    %117 = vmatprep.mubr.f32.mxu0 0.0
    %118 = vmatmul.mubr.f32.gmra.mrb[0].mxu0 %v29
    %v119 = vpop.f32.mrb[0].mxu0
    %v120 = vadd.f32 %v51, %v119
    %v121 = vpop.f32.mrb[0].mxu0
    %122 = vdwg.mxu0
    %v123 = vxor.u32 %v120, 2147483648
    %v124 = vmul.f32 %v123, 1.442695
    %v125 = vpow.pop %v124
    %v126 = vadd.f32 %v125, 1.0
    %v127 = vrcp.pop %v126
    %v128 = vmul.f32 1.0, %v127
    %129 = vst [vmem:[#allocation5] sm:$0xff] %v128
    // Predicated region
    $region18: #{_lambda_.1} parent=1 // pred_check
      _
    $region19: #{_lambda_.1} parent=1 // pred_check_branch
      %131 = sbr.rel (0) target = $region21
    $region20: #{_lambda_.1} parent=1 // pred_region
      %s133 = ssub.s32 128, 128
      %134 = vsyncadd [#allocation4], %s133
      %s136 = sshll.u32 [#allocation5], 4
      %s137 = int_to_ptr.vmem [resolvable:$true] %s136
      %139 = dma.vmem_to_hbm [thread:$0]  %s137, 128, %s3, [#allocation4]
    $region21: #{_lambda_.1} parent=1 // pred_fallthru
      _
    // Predicated region
    $region22: #{_lambda_.1} parent=1 // pred_check
      _
    $region23: #{_lambda_.1} parent=1 // pred_check_branch
      %141 = sbr.rel (0) target = $region25
    $region24: #{_lambda_.1} parent=1 // pred_region
      %142 = dma.done [#allocation4], 128
    $region25: #{_lambda_.1} parent=1 // pred_fallthru
      _
    %143 = vsyncpa [#allocation3], 1
    %144 = vsyncpa [#allocation4], 1

</llo_original>
